<compile_context>
chip_gen: v7x
topology: tpu7x:2x2x1
jax: 0.10.0
libtpu: 0.0.40
codegen_flags: <defaults>
</compile_context>

<pallas_src>
import jax
import jax.numpy as jnp
from jax.experimental import pallas as pl
from jax.experimental.pallas import tpu as pltpu

HIDDEN = 64


def _round_up(x, m):
    return ((x + m - 1) // m) * m


def _cdiv(a, b):
    return (a + b - 1) // b


# ----------------------------------------------------------------------------
# Kernel
# ----------------------------------------------------------------------------
def _make_kernel(obs_dim, act_dim, off_act, off_w2, off_w3):
    """Kernel closure over the static packing offsets (plain Python ints)."""

    def kernel(obs_ref, act_ref, w_ref, c_ref, o_ref):
        # obs_ref : (TILE_B, obs_dim) f32     act_ref : (TILE_B, act_dim) f32
        # w_ref   : (rows, 64) bf16 packed [w1_obs | w1_act | w2 | w3^T row]
        # c_ref   : (8, 64) f32 packed   [b1 ; b2 ; (b3 at [2,0]) ; zeros]
        # o_ref   : (1, TILE_B) f32 lane-dense output row

        # Cast streamed activations to bf16 so the MXU runs native bf16 passes
        # (f32 matmul is emulated with multiple passes on v6e/v7x).
        obs = obs_ref[...].astype(jnp.bfloat16)
        act = act_ref[...].astype(jnp.bfloat16)

        w1o = w_ref[0:obs_dim, :]                       # (obs_dim, 64)
        w1a = w_ref[off_act:off_act + act_dim, :]       # (act_dim, 64)
        w2 = w_ref[off_w2:off_w2 + HIDDEN, :]           # (64, 64)
        w3p = w_ref[off_w3:off_w3 + 8, :]               # (8, 64): row0 = w3^T, rest 0

        b1 = c_ref[0:1, :]                              # (1, 64) f32
        b2 = c_ref[1:2, :]                              # (1, 64) f32
        b3 = c_ref[2:3, 0:1]                            # (1, 1)  f32

        # Layer 1: split matmul replaces concat([obs, act]) @ W1 (no HBM concat).
        h1 = (jnp.dot(obs, w1o, preferred_element_type=jnp.float32)
              + jnp.dot(act, w1a, preferred_element_type=jnp.float32)
              + b1)
        h1 = jnp.maximum(h1, 0.01 * h1)                 # LeakyReLU(0.01), f32
        h1 = h1.astype(jnp.bfloat16)                    # downcast only for next dot

        # Layer 2
        h2 = jnp.dot(h1, w2, preferred_element_type=jnp.float32) + b2
        h2 = jnp.maximum(h2, 0.01 * h2)
        h2 = h2.astype(jnp.bfloat16)

        # Layer 3: (8,64) x (TILE_B,64)^T -> (8, TILE_B); same contraction
        # pattern as flash-attention q.k^T, lowered natively on the MXU (large
        # operand h2 is NOT materially transposed).  Row 0 is the real output.
        out8 = jax.lax.dot_general(
            w3p, h2,
            dimension_numbers=(((1,), (1,)), ((), ())),
            preferred_element_type=jnp.float32,
        )
        o_ref[...] = (out8[0:1, :] + b3).astype(o_ref.dtype)

    return kernel


# ----------------------------------------------------------------------------
# Wrapper
# ----------------------------------------------------------------------------
def critic_forward(obs, act, w_pack, c_pack, offsets, *, tile_b_max=4096):
    """obs: (B, obs_dim) f32, act: (B, act_dim) f32  ->  (B, 1) f32."""
    B, obs_dim = obs.shape
    act_dim = act.shape[1]
    off_act, off_w2, off_w3 = offsets

    # Large tiles amortize the ~0.35us per-grid-step overhead; aim for >= 2 grid
    # steps on mid/large batches so both v7x TensorCores get work.  tile_b is a
    # multiple of 128 -> (8,128)-legal input blocks and full-lane output stores.
    tile_b = min(tile_b_max, max(128, _round_up(_cdiv(B, 2), 128)))
    grid_b = _cdiv(B, tile_b)
    out_cols = grid_b * tile_b        # pad only the output allocation, not inputs

    kernel = _make_kernel(obs_dim, act_dim, off_act, off_w2, off_w3)
    const2d = lambda a: pl.BlockSpec(a.shape, lambda i: (0, 0))  # VMEM-resident

    out_row = pl.pallas_call(
        kernel,
        out_shape=jax.ShapeDtypeStruct((1, out_cols), jnp.float32),
        grid=(grid_b,),
        in_specs=[
            pl.BlockSpec((tile_b, obs_dim), lambda i: (i, 0)),
            pl.BlockSpec((tile_b, act_dim), lambda i: (i, 0)),
            const2d(w_pack),
            const2d(c_pack),
        ],
        out_specs=pl.BlockSpec((1, tile_b), lambda i: (0, i)),
        compiler_params=pltpu.CompilerParams(
            dimension_semantics=("parallel",)),
    )(obs, act, w_pack, c_pack)

    # Lanes >= B come from unspecified boundary-tile rows; rows are independent,
    # so we simply discard them here.
    return out_row[0, :B].reshape(B, 1)


# ----------------------------------------------------------------------------
# Parameter construction (torch-equivalent layout, packed for the kernel)
# ----------------------------------------------------------------------------
def init_params(key, obs_dim, act_dim, hidden=HIDDEN):
    """f32 master params in (in, out) layout, mirroring the PyTorch module."""
    def xavier(k, fan_in, fan_out):
        bound = float(jnp.sqrt(6.0 / (fan_in + fan_out)))
        return jax.random.uniform(k, (fan_in, fan_out), jnp.float32,
                                  minval=-bound, maxval=bound)

    d_in = obs_dim + act_dim
    k1, k2, k3, k4, k5, k6 = jax.random.split(key, 6)
    params = dict(
        w1=xavier(k1, d_in, hidden),
        b1=jax.random.uniform(k4, (hidden,), jnp.float32, -0.1, 0.1),
        w2=xavier(k2, hidden, hidden),
        b2=jax.random.uniform(k5, (hidden,), jnp.float32, -0.1, 0.1),
        w3=xavier(k3, hidden, 1),
        b3=jax.random.uniform(k6, (1,), jnp.float32, -0.1, 0.1),
    )
    return params


def pack_params(params, obs_dim, act_dim, hidden=HIDDEN):
    """Pack weights into one bf16 block + biases into one f32 block.

    Offsets are 16-row aligned (bf16 sublane packing) so the in-kernel static
    slices stay cheap.  Gap rows are zero (they never contribute to any dot).
    """
    off_act = _round_up(obs_dim, 16)
    off_w2 = off_act + _round_up(act_dim, 16)
    off_w3 = off_w2 + hidden
    rows = _round_up(off_w3 + 8, 16)

    w_pack = jnp.zeros((rows, hidden), jnp.float32)
    w_pack = w_pack.at[0:obs_dim].set(params["w1"][:obs_dim])
    w_pack = w_pack.at[off_act:off_act + act_dim].set(params["w1"][obs_dim:])
    w_pack = w_pack.at[off_w2:off_w2 + hidden].set(params["w2"])
    w_pack = w_pack.at[off_w3].set(params["w3"][:, 0])       # w3^T as one row
    w_pack = w_pack.astype(jnp.bfloat16)
    # TODO(synk): if the data producer can emit bf16 obs/act, pass them straight
    # through to halve HBM traffic on bandwidth-limited v5e.

    c_pack = jnp.zeros((8, hidden), jnp.float32)
    c_pack = c_pack.at[0].set(params["b1"])
    c_pack = c_pack.at[1].set(params["b2"])
    c_pack = c_pack.at[2, 0].set(params["b3"][0])

    return w_pack, c_pack, (off_act, off_w2, off_w3)


# ----------------------------------------------------------------------------
# Pure-JAX reference (mirrors the PyTorch module: concat -> 3 Linears)
# ----------------------------------------------------------------------------
def reference_forward(obs, act, params):
    x = jnp.concatenate([obs, act], axis=1)
    h1 = x @ params["w1"] + params["b1"]
    h1 = jnp.where(h1 > 0, h1, 0.01 * h1)
    h2 = h1 @ params["w2"] + params["b2"]
    h2 = jnp.where(h2 > 0, h2, 0.01 * h2)
    return h2 @ params["w3"] + params["b3"]


def _bf16_rounded(params):
    """Weights rounded through bf16 (matching kernel storage), biases f32."""
    out = dict(params)
    for k in ("w1", "w2", "w3"):
        out[k] = params[k].astype(jnp.bfloat16).astype(jnp.float32)
    return out


if __name__ == "__main__":
    key = jax.random.PRNGKey(0)
    kp, ko, ka, ko2, ka2 = jax.random.split(key, 5)

    B, obs_dim, act_dim = 8, 16, 8     # small shapes consistent with the module
    params = init_params(kp, obs_dim, act_dim)
    w_pack, c_pack, offs = pack_params(params, obs_dim, act_dim)
    params_ref = _bf16_rounded(params)

    obs = jax.random.normal(ko, (B, obs_dim), jnp.float32)
    act = jax.random.normal(ka, (B, act_dim), jnp.float32)

    out = jax.block_until_ready(critic_forward(obs, act, w_pack, c_pack, offs))
    ref = reference_forward(obs, act, params_ref)
    assert out.shape == (B, 1)
    assert jnp.allclose(out, ref, atol=5e-2, rtol=5e-2), "mismatch (small B)"

    # Ragged batch exercising the multi-step grid (2 tiles of 640) + no-pad path.
    B2 = 1030
    obs2 = jax.random.normal(ko2, (B2, obs_dim), jnp.float32)
    act2 = jax.random.normal(ka2, (B2, act_dim), jnp.float32)
    out2 = jax.block_until_ready(critic_forward(obs2, act2, w_pack, c_pack, offs))
    ref2 = reference_forward(obs2, act2, params_ref)
    assert out2.shape == (B2, 1)
    assert jnp.allclose(out2, ref2, atol=5e-2, rtol=5e-2), "mismatch (tiled B)"

    print("KERNEL_OK")
</pallas_src>

<mosaic_0001>
module attributes {stable_mosaic.version = 11 : i64} {
  func.func @kernel(%arg0: i32, %arg1: memref<128x16xf32, #tpu.memory_space<vmem>>, %arg2: memref<128x8xf32, #tpu.memory_space<vmem>>, %arg3: memref<112x64xbf16, #tpu.memory_space<vmem>>, %arg4: memref<8x64xf32, #tpu.memory_space<vmem>>, %arg5: memref<1x128xf32, #tpu.memory_space<vmem>>) attributes {dimension_semantics = [#tpu.dimension_semantics<parallel>], iteration_bounds = array<i64: 1>, scalar_prefetch = 0 : i64, scratch_operands = 0 : i64, tpu.core_type = #tpu.core_type<tc>, window_params = [{transform_indices = @transform_0, window_bounds = array<i64: 128, 16>}, {transform_indices = @transform_1, window_bounds = array<i64: 128, 8>}, {pipeline_mode = #tpu.pipeline_mode<synchronous>, transform_indices = @transform_2, window_bounds = array<i64: 112, 64>}, {pipeline_mode = #tpu.pipeline_mode<synchronous>, transform_indices = @transform_3, window_bounds = array<i64: 8, 64>}, {transform_indices = @transform_4, window_bounds = array<i64: 1, 128>}]} {
    %c0 = arith.constant 0 : index
    %c0_0 = arith.constant 0 : index
    %0 = vector.load %arg1[%c0, %c0_0] : memref<128x16xf32, #tpu.memory_space<vmem>>, vector<128x16xf32>
    %1 = arith.truncf %0 : vector<128x16xf32> to vector<128x16xbf16>
    %c0_1 = arith.constant 0 : index
    %c0_2 = arith.constant 0 : index
    %2 = vector.load %arg2[%c0_1, %c0_2] : memref<128x8xf32, #tpu.memory_space<vmem>>, vector<128x8xf32>
    %3 = arith.truncf %2 : vector<128x8xf32> to vector<128x8xbf16>
    %c0_3 = arith.constant 0 : index
    %c0_4 = arith.constant 0 : index
    %4 = vector.load %arg3[%c0_3, %c0_4] : memref<112x64xbf16, #tpu.memory_space<vmem>>, vector<16x64xbf16>
    %c16 = arith.constant 16 : index
    %c0_5 = arith.constant 0 : index
    %5 = vector.load %arg3[%c16, %c0_5] : memref<112x64xbf16, #tpu.memory_space<vmem>>, vector<8x64xbf16>
    %c32 = arith.constant 32 : index
    %c0_6 = arith.constant 0 : index
    %6 = vector.load %arg3[%c32, %c0_6] : memref<112x64xbf16, #tpu.memory_space<vmem>>, vector<64x64xbf16>
    %c96 = arith.constant 96 : index
    %c0_7 = arith.constant 0 : index
    %7 = vector.load %arg3[%c96, %c0_7] : memref<112x64xbf16, #tpu.memory_space<vmem>>, vector<8x64xbf16>
    %c0_8 = arith.constant 0 : index
    %c0_9 = arith.constant 0 : index
    %8 = vector.load %arg4[%c0_8, %c0_9] : memref<8x64xf32, #tpu.memory_space<vmem>>, vector<1x64xf32>
    %c1 = arith.constant 1 : index
    %c0_10 = arith.constant 0 : index
    %9 = vector.load %arg4[%c1, %c0_10] : memref<8x64xf32, #tpu.memory_space<vmem>>, vector<1x64xf32>
    %c2 = arith.constant 2 : index
    %c0_11 = arith.constant 0 : index
    %10 = vector.load %arg4[%c2, %c0_11] : memref<8x64xf32, #tpu.memory_space<vmem>>, vector<1x1xf32>
    %cst = arith.constant dense<0.000000e+00> : vector<128x64xf32>
    %11 = tpu.matmul %1, %4, %cst {dimension_numbers = #tpu.dot_dimension_numbers<[1], [0], [0], [1], [0, 0, 1, 1], [], []>} : vector<128x16xbf16>, vector<16x64xbf16>, vector<128x64xf32> -> vector<128x64xf32>
    %cst_12 = arith.constant dense<0.000000e+00> : vector<128x64xf32>
    %12 = tpu.matmul %3, %5, %cst_12 {dimension_numbers = #tpu.dot_dimension_numbers<[1], [0], [0], [1], [0, 0, 1, 1], [], []>} : vector<128x8xbf16>, vector<8x64xbf16>, vector<128x64xf32> -> vector<128x64xf32>
    %13 = arith.addf %11, %12 : vector<128x64xf32>
    %14 = vector.broadcast %8 : vector<1x64xf32> to vector<128x64xf32>
    %15 = arith.addf %13, %14 : vector<128x64xf32>
    %cst_13 = arith.constant 0.00999999977 : f32
    %16 = vector.broadcast %cst_13 : f32 to vector<128x64xf32>
    %17 = arith.mulf %16, %15 : vector<128x64xf32>
    %18 = arith.maximumf %15, %17 : vector<128x64xf32>
    %19 = arith.truncf %18 : vector<128x64xf32> to vector<128x64xbf16>
    %cst_14 = arith.constant dense<0.000000e+00> : vector<128x64xf32>
    %20 = tpu.matmul %19, %6, %cst_14 {dimension_numbers = #tpu.dot_dimension_numbers<[1], [0], [0], [1], [0, 0, 1, 1], [], []>} : vector<128x64xbf16>, vector<64x64xbf16>, vector<128x64xf32> -> vector<128x64xf32>
    %21 = vector.broadcast %9 : vector<1x64xf32> to vector<128x64xf32>
    %22 = arith.addf %20, %21 : vector<128x64xf32>
    %cst_15 = arith.constant 0.00999999977 : f32
    %23 = vector.broadcast %cst_15 : f32 to vector<128x64xf32>
    %24 = arith.mulf %23, %22 : vector<128x64xf32>
    %25 = arith.maximumf %22, %24 : vector<128x64xf32>
    %26 = arith.truncf %25 : vector<128x64xf32> to vector<128x64xbf16>
    %cst_16 = arith.constant dense<0.000000e+00> : vector<8x128xf32>
    %27 = tpu.matmul %7, %26, %cst_16 {dimension_numbers = #tpu.dot_dimension_numbers<[1], [1], [0], [0], [0, 0, 1, 0], [], []>} : vector<8x64xbf16>, vector<128x64xbf16>, vector<8x128xf32> -> vector<8x128xf32>
    %28 = vector.extract_strided_slice %27 {offsets = [0, 0], sizes = [1, 128], strides = [1, 1]} : vector<8x128xf32> to vector<1x128xf32>
    %29 = vector.broadcast %10 : vector<1x1xf32> to vector<1x128xf32>
    %30 = arith.addf %28, %29 : vector<1x128xf32>
    %c0_17 = arith.constant 0 : index
    %c0_18 = arith.constant 0 : index
    %31 = vector.load %arg5[%c0_17, %c0_18] : memref<1x128xf32, #tpu.memory_space<vmem>>, vector<1x128xf32>
    tpu.vector_store %arg5[%c0_17, %c0_18], %30 {strides = array<i32>} : memref<1x128xf32, #tpu.memory_space<vmem>>, vector<1x128xf32>,
    return
  }
  func.func @transform_0(%arg0: i32) -> (i32, i32) {
    %c0_i32 = arith.constant 0 : i32
    %c0_i32_0 = arith.constant 0 : i32
    return %arg0, %c0_i32 : i32, i32
  }
  func.func @transform_1(%arg0: i32) -> (i32, i32) {
    %c0_i32 = arith.constant 0 : i32
    %c0_i32_0 = arith.constant 0 : i32
    return %arg0, %c0_i32 : i32, i32
  }
  func.func @transform_2(%arg0: i32) -> (i32, i32) {
    %c0_i32 = arith.constant 0 : i32
    %c0_i32_0 = arith.constant 0 : i32
    %c0_i32_1 = arith.constant 0 : i32
    return %c0_i32, %c0_i32_0 : i32, i32
  }
  func.func @transform_3(%arg0: i32) -> (i32, i32) {
    %c0_i32 = arith.constant 0 : i32
    %c0_i32_0 = arith.constant 0 : i32
    %c0_i32_1 = arith.constant 0 : i32
    return %c0_i32, %c0_i32_0 : i32, i32
  }
  func.func @transform_4(%arg0: i32) -> (i32, i32) {
    %c0_i32 = arith.constant 0 : i32
    %c0_i32_0 = arith.constant 0 : i32
    return %c0_i32, %arg0 : i32, i32
  }
}

</mosaic_0001>

<llo_original>
// kernel: tpu_custom_call.1
$region0: #{tpu_custom_call.1}
  #allocation0 [shape = 'u32[]', space=smem, size = 0x4, offset = 0x4, fixed_abs, tag = 'smem constant byte address 0x4 - core index']
  #allocation1 [shape = 'u32[144,128]{1,0:T(1,128)}', space=vmem, size = 0x12000, scoped, tag = 'internal scratch']
  %s0 = inlined_call_operand.vmem [shape: f32[8,16], index: 0, kind: input, shape index: {}]
  %s1 = inlined_call_operand.vmem [shape: f32[8,8], index: 1, kind: input, shape index: {}]
  %s2 = inlined_call_operand.vmem [shape: bf16[112,64], index: 2, kind: input, shape index: {}]
  %s3 = inlined_call_operand.vmem [shape: f32[8,64], index: 3, kind: input, shape index: {}]
  %s4 = inlined_call_operand.hbm [shape: f32[1,128], index: 4, kind: output, shape index: {}]
  %s5 = sld [smem:[#allocation0]]
  $region26: #{tpu_custom_call.1} parent=0
    _
  %s7 = ssub.s32 1, %s5
  %s8 = scalar_select 0, %s7, %s5
  $region1: #{tpu_custom_call.1} parent=0
    #allocation2 [shape = 'u8[512]{0}', space=vmem, size = 0x400, scoped, tag = 'output window, operand 0, single buffered']
    #allocation3 [shape = 's32[1]{0}', space=sflag, size = 0x4, scoped, tag = 'scoped memory for tpu_custom_call.1']
    %9 = vsyncpa [#allocation3], 0
    // Predicated region
    $region2: #{tpu_custom_call.1} parent=1 // pred_check
      _
    $region3: #{tpu_custom_call.1} parent=1 // pred_check_branch
      %11 = sbr.rel (0) target = $region5
    $region4: #{tpu_custom_call.1} parent=1 // pred_region
      _
    $region5: #{tpu_custom_call.1} parent=1 // pred_fallthru
      _
    // Predicated region
    $region6: #{tpu_custom_call.1} parent=1 // pred_check
      _
    $region7: #{tpu_custom_call.1} parent=1 // pred_check_branch
      %13 = sbr.rel (0) target = $region9
    $region8: #{tpu_custom_call.1} parent=1 // pred_region
      _
    $region9: #{tpu_custom_call.1} parent=1 // pred_fallthru
      _
    // Predicated region
    $region10: #{tpu_custom_call.1} parent=1 // pred_check
      _
    $region11: #{tpu_custom_call.1} parent=1 // pred_check_branch
      %15 = sbr.rel (0) target = $region13
    $region12: #{tpu_custom_call.1} parent=1 // pred_region
      _
    $region13: #{tpu_custom_call.1} parent=1 // pred_fallthru
      _
    // Predicated region
    $region14: #{tpu_custom_call.1} parent=1 // pred_check
      _
    $region15: #{tpu_custom_call.1} parent=1 // pred_check_branch
      %17 = sbr.rel (0) target = $region17
    $region16: #{tpu_custom_call.1} parent=1 // pred_region
      _
    $region17: #{tpu_custom_call.1} parent=1 // pred_fallthru
      _
    %v19 = vld [vmem:[%s0] sm:$0xff]
    %v20 = vld [vmem:[%s0 + $0x8] sm:$0xff]
    %v21 = vld [vmem:[%s0 + $0x10] sm:$0xff]
    %v22 = vld [vmem:[%s0 + $0x18] sm:$0xff]
    %v23 = vld [vmem:[%s0 + $0x20] sm:$0xff]
    %v24 = vld [vmem:[%s0 + $0x28] sm:$0xff]
    %v25 = vld [vmem:[%s0 + $0x30] sm:$0xff]
    %v26 = vld [vmem:[%s0 + $0x38] sm:$0xff]
    %v27 = vld [vmem:[%s0 + $0x40] sm:$0xff]
    %v28 = vld [vmem:[%s0 + $0x48] sm:$0xff]
    %v29 = vld [vmem:[%s0 + $0x50] sm:$0xff]
    %v30 = vld [vmem:[%s0 + $0x58] sm:$0xff]
    %v31 = vld [vmem:[%s0 + $0x60] sm:$0xff]
    %v32 = vld [vmem:[%s0 + $0x68] sm:$0xff]
    %v33 = vld [vmem:[%s0 + $0x70] sm:$0xff]
    %v34 = vld [vmem:[%s0 + $0x78] sm:$0xff]
    %v35 = vpack.c.bf16 %v20, %v19
    %v36 = vpack.c.bf16 %v22, %v21
    %v37 = vpack.c.bf16 %v24, %v23
    %v38 = vpack.c.bf16 %v26, %v25
    %v39 = vpack.c.bf16 %v28, %v27
    %v40 = vpack.c.bf16 %v30, %v29
    %v41 = vpack.c.bf16 %v32, %v31
    %v42 = vpack.c.bf16 %v34, %v33
    %v43 = vld [vmem:[%s1] sm:$0xff]
    %v44 = vld [vmem:[%s1 + $0x8] sm:$0xff]
    %v45 = vld [vmem:[%s1 + $0x10] sm:$0xff]
    %v46 = vld [vmem:[%s1 + $0x18] sm:$0xff]
    %v47 = vld [vmem:[%s1 + $0x20] sm:$0xff]
    %v48 = vld [vmem:[%s1 + $0x28] sm:$0xff]
    %v49 = vld [vmem:[%s1 + $0x30] sm:$0xff]
    %v50 = vld [vmem:[%s1 + $0x38] sm:$0xff]
    %v51 = vld [vmem:[%s1 + $0x40] sm:$0xff]
    %v52 = vld [vmem:[%s1 + $0x48] sm:$0xff]
    %v53 = vld [vmem:[%s1 + $0x50] sm:$0xff]
    %v54 = vld [vmem:[%s1 + $0x58] sm:$0xff]
    %v55 = vld [vmem:[%s1 + $0x60] sm:$0xff]
    %v56 = vld [vmem:[%s1 + $0x68] sm:$0xff]
    %v57 = vld [vmem:[%s1 + $0x70] sm:$0xff]
    %v58 = vld [vmem:[%s1 + $0x78] sm:$0xff]
    %v59 = vpack.c.bf16 %v44, %v43
    %v60 = vpack.c.bf16 %v46, %v45
    %v61 = vpack.c.bf16 %v48, %v47
    %v62 = vpack.c.bf16 %v50, %v49
    %v63 = vpack.c.bf16 %v52, %v51
    %v64 = vpack.c.bf16 %v54, %v53
    %v65 = vpack.c.bf16 %v56, %v55
    %v66 = vpack.c.bf16 %v58, %v57
    %v67 = vld [vmem:[%s2] sm:$0xf]
    %v68 = vld [vmem:[%s2 + $0x4] sm:$0xf]
    %v69 = vld [vmem:[%s2 + $0x8] sm:$0xf]
    %v70 = vld [vmem:[%s2 + $0x10] sm:$0xf]
    %v71 = vld [vmem:[%s2 + $0x14] sm:$0xf]
    %v72 = vld [vmem:[%s2 + $0x18] sm:$0xf]
    %v73 = vld [vmem:[%s2 + $0x1c] sm:$0xf]
    %v74 = vld [vmem:[%s2 + $0x20] sm:$0xf]
    %v75 = vld [vmem:[%s2 + $0x24] sm:$0xf]
    %v76 = vld [vmem:[%s2 + $0x28] sm:$0xf]
    %v77 = vld [vmem:[%s2 + $0x2c] sm:$0xf]
    %v78 = vld [vmem:[%s2 + $0x30] sm:$0xf]
    %v79 = vld [vmem:[%s3] sm:$0x1]
    %v80 = vld [vmem:[%s3 + $0x1] sm:$0x1]
    %v81 = vld [vmem:[%s3 + $0x2] sm:$0x1]
    %vm82 = vcmask 64512
    %v84 = vsel %vm82, %v59, 0
    %v87 = vsel %vm82, %v60, 0
    %v90 = vsel %vm82, %v61, 0
    %v93 = vsel %vm82, %v62, 0
    %v96 = vsel %vm82, %v63, 0
    %v99 = vsel %vm82, %v64, 0
    %v102 = vsel %vm82, %v65, 0
    %v105 = vsel %vm82, %v66, 0
    %vm107 = vcmask 1043456
    %v109 = vsel %vm107, %v69, 0
    %111 = vmatprep.subr.bf16.mxu0 0
    %112 = vmatpush1.bf16.msra.mxu0 %v109
    %113 = vmatprep.subr.bf16.mxu0 0
    %114 = vmatpush1.bf16.msra.mxu0 0
    %115 = vmatprep.subr.bf16.mxu0 0
    %116 = vmatpush1.bf16.msra.mxu0 0
    %117 = vmatprep.subr.bf16.mxu0 0
    %118 = vmatpush1.bf16.msra.mxu0 0
    %119 = vmatprep.subr.bf16.mxu0 0
    %120 = vmatpush1.bf16.msra.mxu0 0
    %121 = vmatprep.subr.bf16.mxu0 0
    %122 = vmatpush1.bf16.msra.mxu0 0
    %123 = vmatprep.subr.bf16.mxu0 0
    %124 = vmatpush1.bf16.msra.mxu0 0
    %125 = vmatprep.subr.bf16.mxu0 0
    %126 = vmatpush1.bf16.msra.mxu0 0
    %127 = vmatprep.subr.bf16.mxu0 0
    %128 = vmatpush1.bf16.msra.mxu0 0
    %129 = vmatprep.subr.bf16.mxu0 0
    %130 = vmatpush1.bf16.msra.mxu0 0
    %131 = vmatprep.subr.bf16.mxu0 0
    %132 = vmatpush1.bf16.msra.mxu0 0
    %133 = vmatprep.subr.bf16.mxu0 0
    %134 = vmatpush1.bf16.msra.mxu0 0
    %135 = vmatprep.subr.bf16.mxu0 0
    %136 = vmatpush1.bf16.msra.mxu0 0
    %137 = vmatprep.subr.bf16.mxu0 0
    %138 = vmatpush1.bf16.msra.mxu0 0
    %139 = vmatprep.subr.bf16.mxu0 0
    %140 = vmatpush1.bf16.msra.mxu0 0
    %141 = vmatprep.subr.bf16.mxu0 0
    %142 = vmatpush1.bf16.msra.mxu0 0
    %143 = vmatprep.mubr.bf16.mxu0 0
    %144 = vmatmul.mubr.bf16.gmra.mrb[0].mxu0 %v84
    %v145 = vpop.f32.mrb[0].mxu0
    %v146 = vadd.f32 0.0, %v145
    %v147 = vpop.f32.mrb[0].mxu0
    %v148 = vpop.f32.mrb[0].mxu0
    %v149 = vadd.f32 0.0, %v148
    %v150 = vpop.f32.mrb[0].mxu0
    %151 = vmatprep.mubr.bf16.mxu0 0
    %152 = vmatmul.mubr.bf16.gmra.mrb[0].mxu0 %v87
    %v153 = vpop.f32.mrb[0].mxu0
    %v154 = vadd.f32 0.0, %v153
    %v155 = vpop.f32.mrb[0].mxu0
    %v156 = vpop.f32.mrb[0].mxu0
    %v157 = vadd.f32 0.0, %v156
    %v158 = vpop.f32.mrb[0].mxu0
    %159 = vmatprep.mubr.bf16.mxu0 0
    %160 = vmatmul.mubr.bf16.gmra.mrb[0].mxu0 %v90
    %v161 = vpop.f32.mrb[0].mxu0
    %v162 = vadd.f32 0.0, %v161
    %v163 = vpop.f32.mrb[0].mxu0
    %v164 = vpop.f32.mrb[0].mxu0
    %v165 = vadd.f32 0.0, %v164
    %v166 = vpop.f32.mrb[0].mxu0
    %167 = vmatprep.mubr.bf16.mxu0 0
    %168 = vmatmul.mubr.bf16.gmra.mrb[0].mxu0 %v93
    %v169 = vpop.f32.mrb[0].mxu0
    %v170 = vadd.f32 0.0, %v169
    %v171 = vpop.f32.mrb[0].mxu0
    %v172 = vpop.f32.mrb[0].mxu0
    %v173 = vadd.f32 0.0, %v172
    %v174 = vpop.f32.mrb[0].mxu0
    %175 = vmatprep.mubr.bf16.mxu0 0
    %176 = vmatmul.mubr.bf16.gmra.mrb[0].mxu0 %v96
    %v177 = vpop.f32.mrb[0].mxu0
    %v178 = vadd.f32 0.0, %v177
    %v179 = vpop.f32.mrb[0].mxu0
    %v180 = vpop.f32.mrb[0].mxu0
    %v181 = vadd.f32 0.0, %v180
    %v182 = vpop.f32.mrb[0].mxu0
    %183 = vmatprep.mubr.bf16.mxu0 0
    %184 = vmatmul.mubr.bf16.gmra.mrb[0].mxu0 %v99
    %v185 = vpop.f32.mrb[0].mxu0
    %v186 = vadd.f32 0.0, %v185
    %v187 = vpop.f32.mrb[0].mxu0
    %v188 = vpop.f32.mrb[0].mxu0
    %v189 = vadd.f32 0.0, %v188
    %v190 = vpop.f32.mrb[0].mxu0
    %191 = vmatprep.mubr.bf16.mxu0 0
    %192 = vmatmul.mubr.bf16.gmra.mrb[0].mxu0 %v102
    %v193 = vpop.f32.mrb[0].mxu0
    %v194 = vadd.f32 0.0, %v193
    %v195 = vpop.f32.mrb[0].mxu0
    %v196 = vpop.f32.mrb[0].mxu0
    %v197 = vadd.f32 0.0, %v196
    %v198 = vpop.f32.mrb[0].mxu0
    %199 = vmatprep.mubr.bf16.mxu0 0
    %200 = vmatmul.mubr.bf16.gmra.mrb[0].mxu0 %v105
    %v201 = vpop.f32.mrb[0].mxu0
    %v202 = vadd.f32 0.0, %v201
    %v203 = vpop.f32.mrb[0].mxu0
    %v204 = vpop.f32.mrb[0].mxu0
    %v205 = vadd.f32 0.0, %v204
    %v206 = vpop.f32.mrb[0].mxu0
    %207 = vdwg.mxu0
    %v210 = vunpack.c.l.b16 %v67
    %v211 = vunpack.c.l.b16 %v68
    %v212 = vpack.c.b16 %v211, %v210
    %vm214 = vcmask 130048
    %v216 = vsel %vm214, %v35, 0
    %v219 = vsel %vm214, %v36, 0
    %v222 = vsel %vm214, %v37, 0
    %v225 = vsel %vm214, %v38, 0
    %v228 = vsel %vm214, %v39, 0
    %v231 = vsel %vm214, %v40, 0
    %v234 = vsel %vm214, %v41, 0
    %v237 = vsel %vm214, %v42, 0
    %239 = vmatprep.subr.bf16.mxu0 0
    %240 = vmatpush1.bf16.msra.mxu0 %v212
    %241 = vmatprep.subr.bf16.mxu0 0
    %242 = vmatpush1.bf16.msra.mxu0 0
    %243 = vmatprep.subr.bf16.mxu0 0
    %244 = vmatpush1.bf16.msra.mxu0 0
    %245 = vmatprep.subr.bf16.mxu0 0
    %246 = vmatpush1.bf16.msra.mxu0 0
    %247 = vmatprep.subr.bf16.mxu0 0
    %248 = vmatpush1.bf16.msra.mxu0 0
    %249 = vmatprep.subr.bf16.mxu0 0
    %250 = vmatpush1.bf16.msra.mxu0 0
    %251 = vmatprep.subr.bf16.mxu0 0
    %252 = vmatpush1.bf16.msra.mxu0 0
    %253 = vmatprep.subr.bf16.mxu0 0
    %254 = vmatpush1.bf16.msra.mxu0 0
    %255 = vmatprep.subr.bf16.mxu0 0
    %256 = vmatpush1.bf16.msra.mxu0 0
    %257 = vmatprep.subr.bf16.mxu0 0
    %258 = vmatpush1.bf16.msra.mxu0 0
    %259 = vmatprep.subr.bf16.mxu0 0
    %260 = vmatpush1.bf16.msra.mxu0 0
    %261 = vmatprep.subr.bf16.mxu0 0
    %262 = vmatpush1.bf16.msra.mxu0 0
    %263 = vmatprep.subr.bf16.mxu0 0
    %264 = vmatpush1.bf16.msra.mxu0 0
    %265 = vmatprep.subr.bf16.mxu0 0
    %266 = vmatpush1.bf16.msra.mxu0 0
    %267 = vmatprep.subr.bf16.mxu0 0
    %268 = vmatpush1.bf16.msra.mxu0 0
    %269 = vmatprep.subr.bf16.mxu0 0
    %270 = vmatpush1.bf16.msra.mxu0 0
    %271 = vmatprep.mubr.bf16.mxu0 0
    %272 = vmatmul.mubr.bf16.gmra.mrb[0].mxu0 %v216
    %v273 = vpop.f32.mrb[0].mxu0
    %v274 = vadd.f32 %v146, %v273
    %v275 = vpop.f32.mrb[0].mxu0
    %v276 = vpop.f32.mrb[0].mxu0
    %v277 = vadd.f32 %v149, %v276
    %v278 = vpop.f32.mrb[0].mxu0
    %279 = vmatprep.mubr.bf16.mxu0 0
    %280 = vmatmul.mubr.bf16.gmra.mrb[0].mxu0 %v219
    %v281 = vpop.f32.mrb[0].mxu0
    %v282 = vadd.f32 %v154, %v281
    %v283 = vpop.f32.mrb[0].mxu0
    %v284 = vpop.f32.mrb[0].mxu0
    %v285 = vadd.f32 %v157, %v284
    %v286 = vpop.f32.mrb[0].mxu0
    %287 = vmatprep.mubr.bf16.mxu0 0
    %288 = vmatmul.mubr.bf16.gmra.mrb[0].mxu0 %v222
    %v289 = vpop.f32.mrb[0].mxu0
    %v290 = vadd.f32 %v162, %v289
    %v291 = vpop.f32.mrb[0].mxu0
    %v292 = vpop.f32.mrb[0].mxu0
    %v293 = vadd.f32 %v165, %v292
    %v294 = vpop.f32.mrb[0].mxu0
    %295 = vmatprep.mubr.bf16.mxu0 0
    %296 = vmatmul.mubr.bf16.gmra.mrb[0].mxu0 %v225
    %v297 = vpop.f32.mrb[0].mxu0
    %v298 = vadd.f32 %v170, %v297
    %v299 = vpop.f32.mrb[0].mxu0
    %v300 = vpop.f32.mrb[0].mxu0
    %v301 = vadd.f32 %v173, %v300
    %v302 = vpop.f32.mrb[0].mxu0
    %303 = vmatprep.mubr.bf16.mxu0 0
    %304 = vmatmul.mubr.bf16.gmra.mrb[0].mxu0 %v228
    %v305 = vpop.f32.mrb[0].mxu0
    %v306 = vadd.f32 %v178, %v305
    %v307 = vpop.f32.mrb[0].mxu0
    %v308 = vpop.f32.mrb[0].mxu0
    %v309 = vadd.f32 %v181, %v308
    %v310 = vpop.f32.mrb[0].mxu0
    %311 = vmatprep.mubr.bf16.mxu0 0
    %312 = vmatmul.mubr.bf16.gmra.mrb[0].mxu0 %v231
    %v313 = vpop.f32.mrb[0].mxu0
    %v314 = vadd.f32 %v186, %v313
    %v315 = vpop.f32.mrb[0].mxu0
    %v316 = vpop.f32.mrb[0].mxu0
    %v317 = vadd.f32 %v189, %v316
    %v318 = vpop.f32.mrb[0].mxu0
    %319 = vmatprep.mubr.bf16.mxu0 0
    %320 = vmatmul.mubr.bf16.gmra.mrb[0].mxu0 %v234
    %v321 = vpop.f32.mrb[0].mxu0
    %v322 = vadd.f32 %v194, %v321
    %v323 = vpop.f32.mrb[0].mxu0
    %v324 = vpop.f32.mrb[0].mxu0
    %v325 = vadd.f32 %v197, %v324
    %v326 = vpop.f32.mrb[0].mxu0
    %327 = vmatprep.mubr.bf16.mxu0 0
    %328 = vmatmul.mubr.bf16.gmra.mrb[0].mxu0 %v237
    %v329 = vpop.f32.mrb[0].mxu0
    %v330 = vadd.f32 %v202, %v329
    %v331 = vpop.f32.mrb[0].mxu0
    %v332 = vpop.f32.mrb[0].mxu0
    %v333 = vadd.f32 %v205, %v332
    %v334 = vpop.f32.mrb[0].mxu0
    %335 = vdwg.mxu0
    %v336 = vlaneseq
    %v337 = vshrl.u32 %v336, 7
    %v338 = vsub.s32 0, %v337
    %v339 = vrot.slane %v79, %v338
    %v340 = vadd.f32 %v274, %v339
    %v341 = vadd.f32 %v277, %v339
    %v342 = vadd.f32 %v282, %v339
    %v343 = vadd.f32 %v285, %v339
    %v344 = vadd.f32 %v290, %v339
    %v345 = vadd.f32 %v293, %v339
    %v346 = vadd.f32 %v298, %v339
    %v347 = vadd.f32 %v301, %v339
    %v348 = vadd.f32 %v306, %v339
    %v349 = vadd.f32 %v309, %v339
    %v350 = vadd.f32 %v314, %v339
    %v351 = vadd.f32 %v317, %v339
    %v352 = vadd.f32 %v322, %v339
    %v353 = vadd.f32 %v325, %v339
    %v354 = vadd.f32 %v330, %v339
    %v355 = vadd.f32 %v333, %v339
    %v356 = vmul.f32 %v340, 0.01
    %v357 = vmul.f32 %v341, 0.01
    %v358 = vmul.f32 %v342, 0.01
    %v359 = vmul.f32 %v343, 0.01
    %v360 = vmul.f32 %v344, 0.01
    %v361 = vmul.f32 %v345, 0.01
    %v362 = vmul.f32 %v346, 0.01
    %v363 = vmul.f32 %v347, 0.01
    %v364 = vmul.f32 %v348, 0.01
    %v365 = vmul.f32 %v349, 0.01
    %v366 = vmul.f32 %v350, 0.01
    %v367 = vmul.f32 %v351, 0.01
    %v368 = vmul.f32 %v352, 0.01
    %v369 = vmul.f32 %v353, 0.01
    %v370 = vmul.f32 %v354, 0.01
    %v371 = vmul.f32 %v355, 0.01
    %v372 = vmax.f32 %v340, %v356
    %v373 = vmax.f32 %v341, %v357
    %v374 = vmax.f32 %v342, %v358
    %v375 = vmax.f32 %v343, %v359
    %v376 = vmax.f32 %v344, %v360
    %v377 = vmax.f32 %v345, %v361
    %v378 = vmax.f32 %v346, %v362
    %v379 = vmax.f32 %v347, %v363
    %v380 = vmax.f32 %v348, %v364
    %v381 = vmax.f32 %v349, %v365
    %v382 = vmax.f32 %v350, %v366
    %v383 = vmax.f32 %v351, %v367
    %v384 = vmax.f32 %v352, %v368
    %v385 = vmax.f32 %v353, %v369
    %v386 = vmax.f32 %v354, %v370
    %v387 = vmax.f32 %v355, %v371
    %v388 = vpack.c.bf16 %v373, %v372
    %v389 = vpack.c.bf16 %v375, %v374
    %v390 = vpack.c.bf16 %v377, %v376
    %v391 = vpack.c.bf16 %v379, %v378
    %v392 = vpack.c.bf16 %v381, %v380
    %v393 = vpack.c.bf16 %v383, %v382
    %v394 = vpack.c.bf16 %v385, %v384
    %v395 = vpack.c.bf16 %v387, %v386
    %v396 = vlaneseq
    %v397 = vshrl.u32 %v396, 7
    %v398 = vsub.s32 0, %v397
    %v399 = vrot.slane %v80, %v398
    %v408 = vunpack.c.l.b16 %v70
    %v409 = vunpack.c.l.b16 %v71
    %v410 = vunpack.c.l.b16 %v72
    %v411 = vunpack.c.l.b16 %v73
    %v412 = vunpack.c.l.b16 %v74
    %v413 = vunpack.c.l.b16 %v75
    %v414 = vunpack.c.l.b16 %v76
    %v415 = vunpack.c.l.b16 %v77
    %v416 = vpack.c.b16 %v409, %v408
    %v417 = vpack.c.b16 %v411, %v410
    %v418 = vpack.c.b16 %v413, %v412
    %v419 = vpack.c.b16 %v415, %v414
    %vm424 = vcmask 523264
    %v426 = vsel %vm424, %v388, 0
    %v429 = vsel %vm424, %v389, 0
    %v432 = vsel %vm424, %v390, 0
    %v435 = vsel %vm424, %v391, 0
    %v438 = vsel %vm424, %v392, 0
    %v441 = vsel %vm424, %v393, 0
    %v444 = vsel %vm424, %v394, 0
    %v447 = vsel %vm424, %v395, 0
    %449 = vmatprep.subr.bf16.mxu0 0
    %450 = vmatpush1.bf16.msra.mxu0 %v416
    %451 = vmatprep.subr.bf16.mxu0 0
    %452 = vmatpush1.bf16.msra.mxu0 %v417
    %453 = vmatprep.subr.bf16.mxu0 0
    %454 = vmatpush1.bf16.msra.mxu0 %v418
    %455 = vmatprep.subr.bf16.mxu0 0
    %456 = vmatpush1.bf16.msra.mxu0 %v419
    %457 = vmatprep.subr.bf16.mxu0 0
    %458 = vmatpush1.bf16.msra.mxu0 0
    %459 = vmatprep.subr.bf16.mxu0 0
    %460 = vmatpush1.bf16.msra.mxu0 0
    %461 = vmatprep.subr.bf16.mxu0 0
    %462 = vmatpush1.bf16.msra.mxu0 0
    %463 = vmatprep.subr.bf16.mxu0 0
    %464 = vmatpush1.bf16.msra.mxu0 0
    %465 = vmatprep.subr.bf16.mxu0 0
    %466 = vmatpush1.bf16.msra.mxu0 0
    %467 = vmatprep.subr.bf16.mxu0 0
    %468 = vmatpush1.bf16.msra.mxu0 0
    %469 = vmatprep.subr.bf16.mxu0 0
    %470 = vmatpush1.bf16.msra.mxu0 0
    %471 = vmatprep.subr.bf16.mxu0 0
    %472 = vmatpush1.bf16.msra.mxu0 0
    %473 = vmatprep.subr.bf16.mxu0 0
    %474 = vmatpush1.bf16.msra.mxu0 0
    %475 = vmatprep.subr.bf16.mxu0 0
    %476 = vmatpush1.bf16.msra.mxu0 0
    %477 = vmatprep.subr.bf16.mxu0 0
    %478 = vmatpush1.bf16.msra.mxu0 0
    %479 = vmatprep.subr.bf16.mxu0 0
    %480 = vmatpush1.bf16.msra.mxu0 0
    %481 = vmatprep.mubr.bf16.mxu0 0
    %482 = vmatmul.mubr.bf16.gmra.mrb[0].mxu0 %v426
    %v483 = vpop.f32.mrb[0].mxu0
    %v484 = vadd.f32 %v399, %v483
    %v485 = vpop.f32.mrb[0].mxu0
    %v486 = vpop.f32.mrb[0].mxu0
    %v487 = vadd.f32 %v399, %v486
    %v488 = vpop.f32.mrb[0].mxu0
    %489 = vmatprep.mubr.bf16.mxu0 0
    %490 = vmatmul.mubr.bf16.gmra.mrb[0].mxu0 %v429
    %v491 = vpop.f32.mrb[0].mxu0
    %v492 = vadd.f32 %v399, %v491
    %v493 = vpop.f32.mrb[0].mxu0
    %v494 = vpop.f32.mrb[0].mxu0
    %v495 = vadd.f32 %v399, %v494
    %v496 = vpop.f32.mrb[0].mxu0
    %497 = vmatprep.mubr.bf16.mxu0 0
    %498 = vmatmul.mubr.bf16.gmra.mrb[0].mxu0 %v432
    %v499 = vpop.f32.mrb[0].mxu0
    %v500 = vadd.f32 %v399, %v499
    %v501 = vpop.f32.mrb[0].mxu0
    %v502 = vpop.f32.mrb[0].mxu0
    %v503 = vadd.f32 %v399, %v502
    %v504 = vpop.f32.mrb[0].mxu0
    %505 = vmatprep.mubr.bf16.mxu0 0
    %506 = vmatmul.mubr.bf16.gmra.mrb[0].mxu0 %v435
    %v507 = vpop.f32.mrb[0].mxu0
    %v508 = vadd.f32 %v399, %v507
    %v509 = vpop.f32.mrb[0].mxu0
    %v510 = vpop.f32.mrb[0].mxu0
    %v511 = vadd.f32 %v399, %v510
    %v512 = vpop.f32.mrb[0].mxu0
    %513 = vmatprep.mubr.bf16.mxu0 0
    %514 = vmatmul.mubr.bf16.gmra.mrb[0].mxu0 %v438
    %v515 = vpop.f32.mrb[0].mxu0
    %v516 = vadd.f32 %v399, %v515
    %v517 = vpop.f32.mrb[0].mxu0
    %v518 = vpop.f32.mrb[0].mxu0
    %v519 = vadd.f32 %v399, %v518
    %v520 = vpop.f32.mrb[0].mxu0
    %521 = vmatprep.mubr.bf16.mxu0 0
    %522 = vmatmul.mubr.bf16.gmra.mrb[0].mxu0 %v441
    %v523 = vpop.f32.mrb[0].mxu0
    %v524 = vadd.f32 %v399, %v523
    %v525 = vpop.f32.mrb[0].mxu0
    %v526 = vpop.f32.mrb[0].mxu0
    %v527 = vadd.f32 %v399, %v526
    %v528 = vpop.f32.mrb[0].mxu0
    %529 = vmatprep.mubr.bf16.mxu0 0
    %530 = vmatmul.mubr.bf16.gmra.mrb[0].mxu0 %v444
    %v531 = vpop.f32.mrb[0].mxu0
    %v532 = vadd.f32 %v399, %v531
    %v533 = vpop.f32.mrb[0].mxu0
    %v534 = vpop.f32.mrb[0].mxu0
    %v535 = vadd.f32 %v399, %v534
    %v536 = vpop.f32.mrb[0].mxu0
    %537 = vmatprep.mubr.bf16.mxu0 0
    %538 = vmatmul.mubr.bf16.gmra.mrb[0].mxu0 %v447
    %v539 = vpop.f32.mrb[0].mxu0
    %v540 = vadd.f32 %v399, %v539
    %v541 = vpop.f32.mrb[0].mxu0
    %v542 = vpop.f32.mrb[0].mxu0
    %v543 = vadd.f32 %v399, %v542
    %v544 = vpop.f32.mrb[0].mxu0
    %545 = vdwg.mxu0
    %v546 = vmul.f32 %v484, 0.01
    %v547 = vmul.f32 %v487, 0.01
    %v548 = vmul.f32 %v492, 0.01
    %v549 = vmul.f32 %v495, 0.01
    %v550 = vmul.f32 %v500, 0.01
    %v551 = vmul.f32 %v503, 0.01
    %v552 = vmul.f32 %v508, 0.01
    %v553 = vmul.f32 %v511, 0.01
    %v554 = vmul.f32 %v516, 0.01
    %v555 = vmul.f32 %v519, 0.01
    %v556 = vmul.f32 %v524, 0.01
    %v557 = vmul.f32 %v527, 0.01
    %v558 = vmul.f32 %v532, 0.01
    %v559 = vmul.f32 %v535, 0.01
    %v560 = vmul.f32 %v540, 0.01
    %v561 = vmul.f32 %v543, 0.01
    %v562 = vmax.f32 %v484, %v546
    %v563 = vmax.f32 %v487, %v547
    %v564 = vmax.f32 %v492, %v548
    %v565 = vmax.f32 %v495, %v549
    %v566 = vmax.f32 %v500, %v550
    %v567 = vmax.f32 %v503, %v551
    %v568 = vmax.f32 %v508, %v552
    %v569 = vmax.f32 %v511, %v553
    %v570 = vmax.f32 %v516, %v554
    %v571 = vmax.f32 %v519, %v555
    %v572 = vmax.f32 %v524, %v556
    %v573 = vmax.f32 %v527, %v557
    %v574 = vmax.f32 %v532, %v558
    %v575 = vmax.f32 %v535, %v559
    %v576 = vmax.f32 %v540, %v560
    %v577 = vmax.f32 %v543, %v561
    %v578 = vpack.c.bf16 %v563, %v562
    %v579 = vpack.c.bf16 %v565, %v564
    %v580 = vpack.c.bf16 %v567, %v566
    %v581 = vpack.c.bf16 %v569, %v568
    %v582 = vpack.c.bf16 %v571, %v570
    %v583 = vpack.c.bf16 %v573, %v572
    %v584 = vpack.c.bf16 %v575, %v574
    %v585 = vpack.c.bf16 %v577, %v576
    %v587 = vsel %vm424, %v78, 0
    %v590 = vsel %vm424, %v578, 0
    %v593 = vsel %vm424, %v579, 0
    %v596 = vsel %vm424, %v580, 0
    %v599 = vsel %vm424, %v581, 0
    %v602 = vsel %vm424, %v582, 0
    %v605 = vsel %vm424, %v583, 0
    %v608 = vsel %vm424, %v584, 0
    %v611 = vsel %vm424, %v585, 0
    %613 = vmatprep.subr.bf16.mxu0 0
    %614 = vmatpush1.bf16.xpose.msra.mxu0 %v590
    %615 = vmatprep.subr.bf16.mxu0 0
    %616 = vmatpush1.bf16.xpose.msra.mxu0 %v593
    %617 = vmatprep.subr.bf16.mxu0 0
    %618 = vmatpush1.bf16.xpose.msra.mxu0 %v596
    %619 = vmatprep.subr.bf16.mxu0 0
    %620 = vmatpush1.bf16.xpose.msra.mxu0 %v599
    %621 = vmatprep.subr.bf16.mxu0 0
    %622 = vmatpush1.bf16.xpose.msra.mxu0 %v602
    %623 = vmatprep.subr.bf16.mxu0 0
    %624 = vmatpush1.bf16.xpose.msra.mxu0 %v605
    %625 = vmatprep.subr.bf16.mxu0 0
    %626 = vmatpush1.bf16.xpose.msra.mxu0 %v608
    %627 = vmatprep.subr.bf16.mxu0 0
    %628 = vmatpush1.bf16.xpose.msra.mxu0 %v611
    %629 = vmatprep.subr.bf16.mxu0 0
    %630 = vmatpush1.bf16.xpose.msra.mxu0 0
    %631 = vmatprep.subr.bf16.mxu0 0
    %632 = vmatpush1.bf16.xpose.msra.mxu0 0
    %633 = vmatprep.subr.bf16.mxu0 0
    %634 = vmatpush1.bf16.xpose.msra.mxu0 0
    %635 = vmatprep.subr.bf16.mxu0 0
    %636 = vmatpush1.bf16.xpose.msra.mxu0 0
    %637 = vmatprep.subr.bf16.mxu0 0
    %638 = vmatpush1.bf16.xpose.msra.mxu0 0
    %639 = vmatprep.subr.bf16.mxu0 0
    %640 = vmatpush1.bf16.xpose.msra.mxu0 0
    %641 = vmatprep.subr.bf16.mxu0 0
    %642 = vmatpush1.bf16.xpose.msra.mxu0 0
    %643 = vmatprep.subr.bf16.mxu0 0
    %644 = vmatpush1.bf16.xpose.msra.mxu0 0
    %645 = vmatprep.mubr.bf16.mxu0 0
    %646 = vmatmul.mubr.bf16.gmra.mrb[0].mxu0 %v587
    %v647 = vpop.f32.mrb[0].mxu0
    %v648 = vadd.f32 0.0, %v647
    %v649 = vpop.f32.mrb[0].mxu0
    %v650 = vpop.f32.mrb[0].mxu0
    %v651 = vpop.f32.mrb[0].mxu0
    %652 = vdwg.mxu0
    %654 = vset.pattern.permute.xlu0 0
    %655 = vperm.xlu0 %654, %v81
    %v656 = vpop.permute.xlu0 %655
    %v658 = vadd.f32 %v648, %v656
    %659 = vst [vmem:[#allocation2] sm:$0x1] %v658
    // Predicated region
    $region18: #{tpu_custom_call.1} parent=1 // pred_check
      _
    $region19: #{tpu_custom_call.1} parent=1 // pred_check_branch
      %661 = sbr.rel (0) target = $region21
    $region20: #{tpu_custom_call.1} parent=1 // pred_region
      %s663 = ssub.s32 16, 16
      %664 = vsyncadd [#allocation3], %s663
      %s666 = sshll.u32 [#allocation2], 4
      %s667 = int_to_ptr.vmem [resolvable:$true] %s666
      %669 = dma.vmem_to_hbm [thread:$0]  %s667, 16, %s4, [#allocation3]
    $region21: #{tpu_custom_call.1} parent=1 // pred_fallthru
      _
    // Predicated region
    $region22: #{tpu_custom_call.1} parent=1 // pred_check
      _
    $region23: #{tpu_custom_call.1} parent=1 // pred_check_branch
      %671 = sbr.rel (0) target = $region25
    $region24: #{tpu_custom_call.1} parent=1 // pred_region
      %672 = dma.done [#allocation3], 16
    $region25: #{tpu_custom_call.1} parent=1 // pred_fallthru
      _
    %673 = vsyncpa [#allocation3], 1

</llo_original>
